<compile_context>
chip_gen: v6e
topology: v6e:2x2x1
jax: 0.10.0
libtpu: 0.0.40
codegen_flags: <defaults>
</compile_context>

<pallas_src>
import jax
import jax.numpy as jnp
from jax import lax
from jax.experimental import pallas as pl
from jax.experimental.pallas import tpu as pltpu

# Safe on every generation: <= physical VMEM on v7x (64 MiB), >= the scoped
# default on v5e (16 MiB), and comfortably above what these tiles need.
_VMEM_LIMIT_BYTES = 32 * 1024 * 1024


# ----------------------------------------------------------------------------
# Kernel 1: fused QKV projection, three separate lane-aligned outputs
# ----------------------------------------------------------------------------
def _qkv_proj_kernel(x_ref, w_ref, b_ref, q_ref, k_ref, v_ref):
    # x_ref: (tm, d_model) f32 -> cast to bf16 in-kernel for the MXU.
    # w_ref: (d_model, 3d) bf16 (resident), b_ref: (1, 3d) f32 (resident).
    x = x_ref[...].astype(jnp.bfloat16)
    acc = jnp.dot(x, w_ref[...], preferred_element_type=jnp.float32)
    acc = acc + b_ref[...]
    d = q_ref.shape[-1]
    # Static lane slices of the f32 accumulator (in-VMEM/vreg only, no HBM
    # round trip); each output block is a dense (tm, d) store.
    q_ref[...] = acc[:, :d].astype(q_ref.dtype)
    k_ref[...] = acc[:, d:2 * d].astype(k_ref.dtype)
    v_ref[...] = acc[:, 2 * d:].astype(v_ref.dtype)


def _qkv_projection(x2d, w_qkv, b_qkv, d, *, tm):
    M, d_model = x2d.shape
    d3 = w_qkv.shape[1]
    flops = 2 * M * d_model * d3
    bytes_accessed = (x2d.size * 4            # x read once (f32)
                      + w_qkv.size * 2        # weights resident, read once
                      + b_qkv.size * 4
                      + 3 * M * d * 2)        # q/k/v bf16 writes
    qkv_struct = jax.ShapeDtypeStruct((M, d), jnp.bfloat16)
    out_spec = pl.BlockSpec((tm, d), lambda i: (i, 0))
    return pl.pallas_call(
        _qkv_proj_kernel,
        out_shape=(qkv_struct, qkv_struct, qkv_struct),
        grid_spec=pltpu.PrefetchScalarGridSpec(
            num_scalar_prefetch=0,
            grid=(M // tm,),
            in_specs=[
                pl.BlockSpec((tm, d_model), lambda i: (i, 0)),   # x rows
                pl.BlockSpec((d_model, d3), lambda i: (0, 0)),   # fused W_qkv
                pl.BlockSpec((1, d3), lambda i: (0, 0)),         # fused bias
            ],
            out_specs=(out_spec, out_spec, out_spec),             # Q, K, V
        ),
        compiler_params=pltpu.CompilerParams(
            dimension_semantics=("parallel",),
            vmem_limit_bytes=_VMEM_LIMIT_BYTES),
        cost_estimate=pl.CostEstimate(
            flops=flops, transcendentals=0, bytes_accessed=bytes_accessed),
    )(x2d, w_qkv, b_qkv)


# ----------------------------------------------------------------------------
# Kernel 2: flash-attention forward (online softmax, tiled over the sequence)
# ----------------------------------------------------------------------------
def _flash_attn_kernel(q_ref, k_ref, v_ref, o_ref, m_sc, l_sc, acc_sc):
    kv = pl.program_id(2)

    @pl.when(kv == 0)
    def _init():
        m_sc[...] = jnp.full(m_sc.shape, -jnp.inf, dtype=m_sc.dtype)
        l_sc[...] = jnp.zeros(l_sc.shape, dtype=l_sc.dtype)
        acc_sc[...] = jnp.zeros(acc_sc.shape, dtype=acc_sc.dtype)

    # scores = q @ k^T, contracting the last dims directly (no explicit
    # transpose / XLU relayout).  q is pre-scaled by 1/sqrt(d) in the wrapper.
    s = lax.dot_general(
        q_ref[...], k_ref[...],
        dimension_numbers=(((1,), (1,)), ((), ())),
        preferred_element_type=jnp.float32)                      # (tq, tk) f32

    m_prev = m_sc[...]
    m_new = jnp.maximum(m_prev, jnp.max(s, axis=-1, keepdims=True))
    alpha = jnp.exp(m_prev - m_new)
    p = jnp.exp(s - m_new)
    l_sc[...] = alpha * l_sc[...] + jnp.sum(p, axis=-1, keepdims=True)
    acc_sc[...] = alpha * acc_sc[...] + jnp.dot(
        p.astype(v_ref.dtype), v_ref[...], preferred_element_type=jnp.float32)
    m_sc[...] = m_new

    @pl.when(kv == pl.num_programs(2) - 1)
    def _finalize():
        # EUP approximate reciprocal: normalization rides a mostly idle slot.
        inv_l = pl.reciprocal(l_sc[...], approx=True)
        o_ref[...] = (acc_sc[...] * inv_l).astype(o_ref.dtype)


def _flash_attention(q, k, v, *, tq, tk):
    B, N, d = q.shape
    n_q = N // tq
    flops = 4 * B * N * N * d                 # QK^T + attn@V
    bytes_accessed = (q.size * 2                      # Q read once
                      + (k.size + v.size) * 2 * n_q   # K/V re-read per q tile
                      + B * N * d * 4)                # f32 output write
    return pl.pallas_call(
        _flash_attn_kernel,
        out_shape=jax.ShapeDtypeStruct((B, N, d), jnp.float32),
        grid_spec=pltpu.PrefetchScalarGridSpec(
            num_scalar_prefetch=0,
            grid=(B, N // tq, N // tk),
            in_specs=[
                pl.BlockSpec((None, tq, d), lambda b, qi, ki: (b, qi, 0)),  # Q
                pl.BlockSpec((None, tk, d), lambda b, qi, ki: (b, ki, 0)),  # K
                pl.BlockSpec((None, tk, d), lambda b, qi, ki: (b, ki, 0)),  # V
            ],
            out_specs=pl.BlockSpec((None, tq, d), lambda b, qi, ki: (b, qi, 0)),
            scratch_shapes=[
                pltpu.VMEM((tq, 1), jnp.float32),   # running max m
                pltpu.VMEM((tq, 1), jnp.float32),   # running denom l
                pltpu.VMEM((tq, d), jnp.float32),   # output accumulator
            ],
        ),
        # On v7x, switching the leading axis to pltpu.CORE_PARALLEL shards
        # batches across the two TensorCores.
        compiler_params=pltpu.CompilerParams(
            dimension_semantics=("parallel", "parallel", "arbitrary"),
            vmem_limit_bytes=_VMEM_LIMIT_BYTES),
        cost_estimate=pl.CostEstimate(
            flops=flops, transcendentals=B * N * N,
            bytes_accessed=bytes_accessed),
    )(q, k, v)


# ----------------------------------------------------------------------------
# Wrapper
# ----------------------------------------------------------------------------
def _pick_tile(n, cap, multiple):
    """Largest tile <= cap that divides n, preferring multiples of `multiple`
    (then of 8).  Returns n itself when n <= cap (single block / full dim)."""
    if n <= cap:
        return n
    for m in (multiple, 8):
        t = (cap // m) * m
        while t >= m:
            if n % t == 0:
                return t
            t -= m
    # No clean divisor below cap: fall back to the full dimension rather than
    # an invalid block shape.  # TODO(synk): pad awkward N instead of un-tiling.
    return n


def self_attention(x, wq, bq, wk, bk, wv, bv, *, tq=256, tk=512, tm=4096):
    """SelfAttention forward.  x: (B, N, d_model); w*: (d, d_model) torch-Linear
    layout; b*: (d,).  Dropout is eval-mode identity; mask=None path only."""
    B, N, d_model = x.shape
    d = wq.shape[0]
    scale = 1.0 / (d ** 0.5)        # Kt.size(-2) == d in the reference module

    # Fold the softmax scale into Wq/bq (N*d multiplies saved vs scaling the
    # N*N scores), fuse the three projections into one (d_model, 3d) weight.
    w_qkv = jnp.concatenate(
        [jnp.asarray(wq).T * scale, jnp.asarray(wk).T, jnp.asarray(wv).T],
        axis=1).astype(jnp.bfloat16)                          # (d_model, 3d)
    b_qkv = jnp.concatenate(
        [jnp.asarray(bq) * scale, jnp.asarray(bk), jnp.asarray(bv)]
    ).reshape(1, 3 * d).astype(jnp.float32)

    # Projection phase: fold batch into M so the MXU sees B*N rows at once.
    # x stays f32; the bf16 cast happens in-kernel (single HBM read of x).
    M = B * N
    tm = _pick_tile(M, tm, 256)
    x2d = x.reshape(M, d_model)                               # free reshape
    q2d, k2d, v2d = _qkv_projection(x2d, w_qkv, b_qkv, d, tm=tm)

    # Leading-dim splits only -> no relayout copies.
    q = q2d.reshape(B, N, d)        # already carries the 1/sqrt(d) scale
    k = k2d.reshape(B, N, d)
    v = v2d.reshape(B, N, d)

    tq = _pick_tile(N, tq, 128)     # sublane dim of the score tile
    tk = _pick_tile(N, tk, 128)     # lane dim of the score tile: keep 128-dense
    return _flash_attention(q, k, v, tq=tq, tk=tk)


def _reference(x, wq, bq, wk, bk, wv, bv):
    """Pure-JAX f32 reference mirroring the PyTorch forward (dropout eval-mode)."""
    Q = x @ wq.T + bq
    K = x @ wk.T + bk
    V = x @ wv.T + bv
    d = wq.shape[0]
    scores = jnp.einsum('bmd,bnd->bmn', Q, K) * (1.0 / d ** 0.5)
    attn = jax.nn.softmax(scores, axis=-1)
    return jnp.einsum('bmn,bnd->bmd', attn, V)


if __name__ == "__main__":
    B, N, d_model, d = 2, 256, 64, 64   # small, but exercises both kernels

    key = jax.random.PRNGKey(0)
    kx, kwq, kbq, kwk, kbk, kwv, kbv = jax.random.split(key, 7)

    x = jax.random.normal(kx, (B, N, d_model), dtype=jnp.float32)

    # Deterministic nn.Linear-style init: uniform(-1/sqrt(fan_in), 1/sqrt(fan_in))
    bound = 1.0 / (d_model ** 0.5)
    wq = jax.random.uniform(kwq, (d, d_model), minval=-bound, maxval=bound)
    bq = jax.random.uniform(kbq, (d,), minval=-bound, maxval=bound)
    wk = jax.random.uniform(kwk, (d, d_model), minval=-bound, maxval=bound)
    bk = jax.random.uniform(kbk, (d,), minval=-bound, maxval=bound)
    wv = jax.random.uniform(kwv, (d, d_model), minval=-bound, maxval=bound)
    bv = jax.random.uniform(kbv, (d,), minval=-bound, maxval=bound)

    out = self_attention(x, wq, bq, wk, bk, wv, bv)
    out = jax.block_until_ready(out)

    ref = _reference(x, wq, bq, wk, bk, wv, bv)
    assert out.shape == (B, N, d)
    max_err = float(jnp.max(jnp.abs(out - ref)))
    # bf16 MXU operands + EUP approx reciprocal -> loose tolerance vs f32 ref.
    assert jnp.allclose(out, ref, atol=5e-2, rtol=5e-2), \
        f"mismatch vs reference (max abs err {max_err})"

    print("KERNEL_OK")
</pallas_src>

<mosaic_0001>
module attributes {stable_mosaic.version = 11 : i64} {
  func.func @_qkv_proj_kernel(%arg0: i32, %arg1: memref<512x64xf32, #tpu.memory_space<vmem>>, %arg2: memref<64x192xbf16, #tpu.memory_space<vmem>>, %arg3: memref<1x192xf32, #tpu.memory_space<vmem>>, %arg4: memref<512x64xbf16, #tpu.memory_space<vmem>>, %arg5: memref<512x64xbf16, #tpu.memory_space<vmem>>, %arg6: memref<512x64xbf16, #tpu.memory_space<vmem>>) attributes {dimension_semantics = [#tpu.dimension_semantics<parallel>], iteration_bounds = array<i64: 1>, scalar_prefetch = 0 : i64, scratch_operands = 0 : i64, tpu.core_type = #tpu.core_type<tc>, window_params = [{transform_indices = @transform_0, window_bounds = array<i64: 512, 64>}, {pipeline_mode = #tpu.pipeline_mode<synchronous>, transform_indices = @transform_1, window_bounds = array<i64: 64, 192>}, {pipeline_mode = #tpu.pipeline_mode<synchronous>, transform_indices = @transform_2, window_bounds = array<i64: 1, 192>}, {transform_indices = @transform_3, window_bounds = array<i64: 512, 64>}, {transform_indices = @transform_4, window_bounds = array<i64: 512, 64>}, {transform_indices = @transform_5, window_bounds = array<i64: 512, 64>}]} {
    %c0 = arith.constant 0 : index
    %c0_0 = arith.constant 0 : index
    %0 = vector.load %arg1[%c0, %c0_0] : memref<512x64xf32, #tpu.memory_space<vmem>>, vector<512x64xf32>
    %1 = arith.truncf %0 : vector<512x64xf32> to vector<512x64xbf16>
    %c0_1 = arith.constant 0 : index
    %c0_2 = arith.constant 0 : index
    %2 = vector.load %arg2[%c0_1, %c0_2] : memref<64x192xbf16, #tpu.memory_space<vmem>>, vector<64x192xbf16>
    %cst = arith.constant dense<0.000000e+00> : vector<512x192xf32>
    %3 = tpu.matmul %1, %2, %cst {dimension_numbers = #tpu.dot_dimension_numbers<[1], [0], [0], [1], [0, 0, 1, 1], [], []>} : vector<512x64xbf16>, vector<64x192xbf16>, vector<512x192xf32> -> vector<512x192xf32>
    %c0_3 = arith.constant 0 : index
    %c0_4 = arith.constant 0 : index
    %4 = vector.load %arg3[%c0_3, %c0_4] : memref<1x192xf32, #tpu.memory_space<vmem>>, vector<1x192xf32>
    %5 = vector.broadcast %4 : vector<1x192xf32> to vector<512x192xf32>
    %6 = arith.addf %3, %5 : vector<512x192xf32>
    %7 = vector.extract_strided_slice %6 {offsets = [0, 0], sizes = [512, 64], strides = [1, 1]} : vector<512x192xf32> to vector<512x64xf32>
    %8 = arith.truncf %7 : vector<512x64xf32> to vector<512x64xbf16>
    %c0_5 = arith.constant 0 : index
    %c0_6 = arith.constant 0 : index
    %9 = vector.load %arg4[%c0_5, %c0_6] : memref<512x64xbf16, #tpu.memory_space<vmem>>, vector<512x64xbf16>
    tpu.vector_store %arg4[%c0_5, %c0_6], %8 {strides = array<i32>} : memref<512x64xbf16, #tpu.memory_space<vmem>>, vector<512x64xbf16>,
    %10 = vector.extract_strided_slice %6 {offsets = [0, 64], sizes = [512, 64], strides = [1, 1]} : vector<512x192xf32> to vector<512x64xf32>
    %11 = arith.truncf %10 : vector<512x64xf32> to vector<512x64xbf16>
    %c0_7 = arith.constant 0 : index
    %c0_8 = arith.constant 0 : index
    %12 = vector.load %arg5[%c0_7, %c0_8] : memref<512x64xbf16, #tpu.memory_space<vmem>>, vector<512x64xbf16>
    tpu.vector_store %arg5[%c0_7, %c0_8], %11 {strides = array<i32>} : memref<512x64xbf16, #tpu.memory_space<vmem>>, vector<512x64xbf16>,
    %13 = vector.extract_strided_slice %6 {offsets = [0, 128], sizes = [512, 64], strides = [1, 1]} : vector<512x192xf32> to vector<512x64xf32>
    %14 = arith.truncf %13 : vector<512x64xf32> to vector<512x64xbf16>
    %c0_9 = arith.constant 0 : index
    %c0_10 = arith.constant 0 : index
    %15 = vector.load %arg6[%c0_9, %c0_10] : memref<512x64xbf16, #tpu.memory_space<vmem>>, vector<512x64xbf16>
    tpu.vector_store %arg6[%c0_9, %c0_10], %14 {strides = array<i32>} : memref<512x64xbf16, #tpu.memory_space<vmem>>, vector<512x64xbf16>,
    return
  }
  func.func @transform_0(%arg0: i32) -> (i32, i32) {
    %c0_i32 = arith.constant 0 : i32
    %c0_i32_0 = arith.constant 0 : i32
    return %arg0, %c0_i32 : i32, i32
  }
  func.func @transform_1(%arg0: i32) -> (i32, i32) {
    %c0_i32 = arith.constant 0 : i32
    %c0_i32_0 = arith.constant 0 : i32
    %c0_i32_1 = arith.constant 0 : i32
    return %c0_i32, %c0_i32_0 : i32, i32
  }
  func.func @transform_2(%arg0: i32) -> (i32, i32) {
    %c0_i32 = arith.constant 0 : i32
    %c0_i32_0 = arith.constant 0 : i32
    %c0_i32_1 = arith.constant 0 : i32
    return %c0_i32, %c0_i32_0 : i32, i32
  }
  func.func @transform_3(%arg0: i32) -> (i32, i32) {
    %c0_i32 = arith.constant 0 : i32
    %c0_i32_0 = arith.constant 0 : i32
    return %arg0, %c0_i32 : i32, i32
  }
  func.func @transform_4(%arg0: i32) -> (i32, i32) {
    %c0_i32 = arith.constant 0 : i32
    %c0_i32_0 = arith.constant 0 : i32
    return %arg0, %c0_i32 : i32, i32
  }
  func.func @transform_5(%arg0: i32) -> (i32, i32) {
    %c0_i32 = arith.constant 0 : i32
    %c0_i32_0 = arith.constant 0 : i32
    return %arg0, %c0_i32 : i32, i32
  }
}

</mosaic_0001>

<llo_original>
// kernel: tpu_custom_call.1
$region0: #{tpu_custom_call.1}
  #allocation0 [shape = 'u32[]', space=smem, size = 0x4, offset = 0x4, fixed_abs, tag = 'smem constant byte address 0x4 - core index']
  #allocation1 [shape = 'u32[144,128]{1,0:T(1,128)}', space=vmem, size = 0x12000, scoped, tag = 'internal scratch']
  %s0 = inlined_call_operand.vmem [shape: f32[512,64], index: 0, kind: input, shape index: {}]
  %s1 = inlined_call_operand.vmem [shape: bf16[64,192], index: 1, kind: input, shape index: {}]
  %s2 = inlined_call_operand.vmem [shape: f32[1,192], index: 2, kind: input, shape index: {}]
  %s3 = inlined_call_operand.vmem [shape: bf16[512,64], index: 3, kind: output, shape index: {0}]
  %s4 = inlined_call_operand.vmem [shape: bf16[512,64], index: 4, kind: output, shape index: {1}]
  %s5 = inlined_call_operand.vmem [shape: bf16[512,64], index: 5, kind: output, shape index: {2}]
  %6 = xla_tuple %s3, %s4, %s5
  %s7 = sld [smem:[#allocation0]]
  $region38: #{tpu_custom_call.1} parent=0
    _
  %s9 = ssub.s32 1, %s7
  %s10 = scalar_select 0, %s9, %s7
  // Predicated region
  $region2: #{tpu_custom_call.1} parent=0 // pred_check
    _
  $region3: #{tpu_custom_call.1} parent=0 // pred_check_branch
    %12 = sbr.rel (0) target = $region5
  $region4: #{tpu_custom_call.1} parent=0 // pred_region
    _
  $region5: #{tpu_custom_call.1} parent=0 // pred_fallthru
    _
  // Predicated region
  $region6: #{tpu_custom_call.1} parent=0 // pred_check
    _
  $region7: #{tpu_custom_call.1} parent=0 // pred_check_branch
    %14 = sbr.rel (0) target = $region9
  $region8: #{tpu_custom_call.1} parent=0 // pred_region
    _
  $region9: #{tpu_custom_call.1} parent=0 // pred_fallthru
    _
  // Predicated region
  $region10: #{tpu_custom_call.1} parent=0 // pred_check
    _
  $region11: #{tpu_custom_call.1} parent=0 // pred_check_branch
    %16 = sbr.rel (0) target = $region13
  $region12: #{tpu_custom_call.1} parent=0 // pred_region
    _
  $region13: #{tpu_custom_call.1} parent=0 // pred_fallthru
    _
  %v18 = vld [vmem:[%s0] sm:$0xff]
  %v19 = vld [vmem:[%s0 + $0x8] sm:$0xff]
  %v20 = vld [vmem:[%s0 + $0x10] sm:$0xff]
  %v21 = vld [vmem:[%s0 + $0x18] sm:$0xff]
  %v22 = vld [vmem:[%s0 + $0x20] sm:$0xff]
  %v23 = vld [vmem:[%s0 + $0x28] sm:$0xff]
  %v24 = vld [vmem:[%s0 + $0x30] sm:$0xff]
  %v25 = vld [vmem:[%s0 + $0x38] sm:$0xff]
  %v26 = vld [vmem:[%s0 + $0x40] sm:$0xff]
  %v27 = vld [vmem:[%s0 + $0x48] sm:$0xff]
  %v28 = vld [vmem:[%s0 + $0x50] sm:$0xff]
  %v29 = vld [vmem:[%s0 + $0x58] sm:$0xff]
  %v30 = vld [vmem:[%s0 + $0x60] sm:$0xff]
  %v31 = vld [vmem:[%s0 + $0x68] sm:$0xff]
  %v32 = vld [vmem:[%s0 + $0x70] sm:$0xff]
  %v33 = vld [vmem:[%s0 + $0x78] sm:$0xff]
  %v34 = vld [vmem:[%s0 + $0x80] sm:$0xff]
  %v35 = vld [vmem:[%s0 + $0x88] sm:$0xff]
  %v36 = vld [vmem:[%s0 + $0x90] sm:$0xff]
  %v37 = vld [vmem:[%s0 + $0x98] sm:$0xff]
  %v38 = vld [vmem:[%s0 + $0xa0] sm:$0xff]
  %v39 = vld [vmem:[%s0 + $0xa8] sm:$0xff]
  %v40 = vld [vmem:[%s0 + $0xb0] sm:$0xff]
  %v41 = vld [vmem:[%s0 + $0xb8] sm:$0xff]
  %v42 = vld [vmem:[%s0 + $0xc0] sm:$0xff]
  %v43 = vld [vmem:[%s0 + $0xc8] sm:$0xff]
  %v44 = vld [vmem:[%s0 + $0xd0] sm:$0xff]
  %v45 = vld [vmem:[%s0 + $0xd8] sm:$0xff]
  %v46 = vld [vmem:[%s0 + $0xe0] sm:$0xff]
  %v47 = vld [vmem:[%s0 + $0xe8] sm:$0xff]
  %v48 = vld [vmem:[%s0 + $0xf0] sm:$0xff]
  %v49 = vld [vmem:[%s0 + $0xf8] sm:$0xff]
  %v50 = vld [vmem:[%s0 + $0x100] sm:$0xff]
  %v51 = vld [vmem:[%s0 + $0x108] sm:$0xff]
  %v52 = vld [vmem:[%s0 + $0x110] sm:$0xff]
  %v53 = vld [vmem:[%s0 + $0x118] sm:$0xff]
  %v54 = vld [vmem:[%s0 + $0x120] sm:$0xff]
  %v55 = vld [vmem:[%s0 + $0x128] sm:$0xff]
  %v56 = vld [vmem:[%s0 + $0x130] sm:$0xff]
  %v57 = vld [vmem:[%s0 + $0x138] sm:$0xff]
  %v58 = vld [vmem:[%s0 + $0x140] sm:$0xff]
  %v59 = vld [vmem:[%s0 + $0x148] sm:$0xff]
  %v60 = vld [vmem:[%s0 + $0x150] sm:$0xff]
  %v61 = vld [vmem:[%s0 + $0x158] sm:$0xff]
  %v62 = vld [vmem:[%s0 + $0x160] sm:$0xff]
  %v63 = vld [vmem:[%s0 + $0x168] sm:$0xff]
  %v64 = vld [vmem:[%s0 + $0x170] sm:$0xff]
  %v65 = vld [vmem:[%s0 + $0x178] sm:$0xff]
  %v66 = vld [vmem:[%s0 + $0x180] sm:$0xff]
  %v67 = vld [vmem:[%s0 + $0x188] sm:$0xff]
  %v68 = vld [vmem:[%s0 + $0x190] sm:$0xff]
  %v69 = vld [vmem:[%s0 + $0x198] sm:$0xff]
  %v70 = vld [vmem:[%s0 + $0x1a0] sm:$0xff]
  %v71 = vld [vmem:[%s0 + $0x1a8] sm:$0xff]
  %v72 = vld [vmem:[%s0 + $0x1b0] sm:$0xff]
  %v73 = vld [vmem:[%s0 + $0x1b8] sm:$0xff]
  %v74 = vld [vmem:[%s0 + $0x1c0] sm:$0xff]
  %v75 = vld [vmem:[%s0 + $0x1c8] sm:$0xff]
  %v76 = vld [vmem:[%s0 + $0x1d0] sm:$0xff]
  %v77 = vld [vmem:[%s0 + $0x1d8] sm:$0xff]
  %v78 = vld [vmem:[%s0 + $0x1e0] sm:$0xff]
  %v79 = vld [vmem:[%s0 + $0x1e8] sm:$0xff]
  %v80 = vld [vmem:[%s0 + $0x1f0] sm:$0xff]
  %v81 = vld [vmem:[%s0 + $0x1f8] sm:$0xff]
  %v82 = vpack.c.bf16 %v19, %v18
  %v83 = vpack.c.bf16 %v21, %v20
  %v84 = vpack.c.bf16 %v23, %v22
  %v85 = vpack.c.bf16 %v25, %v24
  %v86 = vpack.c.bf16 %v27, %v26
  %v87 = vpack.c.bf16 %v29, %v28
  %v88 = vpack.c.bf16 %v31, %v30
  %v89 = vpack.c.bf16 %v33, %v32
  %v90 = vpack.c.bf16 %v35, %v34
  %v91 = vpack.c.bf16 %v37, %v36
  %v92 = vpack.c.bf16 %v39, %v38
  %v93 = vpack.c.bf16 %v41, %v40
  %v94 = vpack.c.bf16 %v43, %v42
  %v95 = vpack.c.bf16 %v45, %v44
  %v96 = vpack.c.bf16 %v47, %v46
  %v97 = vpack.c.bf16 %v49, %v48
  %v98 = vpack.c.bf16 %v51, %v50
  %v99 = vpack.c.bf16 %v53, %v52
  %v100 = vpack.c.bf16 %v55, %v54
  %v101 = vpack.c.bf16 %v57, %v56
  %v102 = vpack.c.bf16 %v59, %v58
  %v103 = vpack.c.bf16 %v61, %v60
  %v104 = vpack.c.bf16 %v63, %v62
  %v105 = vpack.c.bf16 %v65, %v64
  %v106 = vpack.c.bf16 %v67, %v66
  %v107 = vpack.c.bf16 %v69, %v68
  %v108 = vpack.c.bf16 %v71, %v70
  %v109 = vpack.c.bf16 %v73, %v72
  %v110 = vpack.c.bf16 %v75, %v74
  %v111 = vpack.c.bf16 %v77, %v76
  %v112 = vpack.c.bf16 %v79, %v78
  %v113 = vpack.c.bf16 %v81, %v80
  %v114 = vld [vmem:[%s1] sm:$0xff]
  %v115 = vld [vmem:[%s1 + $0x8] sm:$0xff]
  %v116 = vld [vmem:[%s1 + $0x10] sm:$0xff]
  %v117 = vld [vmem:[%s1 + $0x18] sm:$0xff]
  %v118 = vld [vmem:[%s1 + $0x20] sm:$0xff]
  %v119 = vld [vmem:[%s1 + $0x28] sm:$0xff]
  %v120 = vld [vmem:[%s1 + $0x30] sm:$0xff]
  %v121 = vld [vmem:[%s1 + $0x38] sm:$0xff]
  %v122 = vld [vmem:[%s2] sm:$0x3]
  %v124 = vlaneseq
  %v125 = vshrl.u32 %v124, 7
  %v126 = vsub.s32 0, %v125
  %v127 = vrot.slane %v122, %v126
  %v128 = vlaneseq
  %v129 = vshrl.u32 %v128, 7
  %v130 = vsub.s32 1, %v129
  %v131 = vrot.slane %v122, %v130
  %v142 = vunpack.c.l.b16 %v114
  %v143 = vunpack.c.h.b16 %v114
  %v144 = vunpack.c.l.b16 %v115
  %v145 = vunpack.c.h.b16 %v115
  %v146 = vunpack.c.l.b16 %v116
  %v147 = vunpack.c.h.b16 %v116
  %v148 = vunpack.c.l.b16 %v117
  %v149 = vunpack.c.h.b16 %v117
  %v150 = vunpack.c.l.b16 %v118
  %v151 = vunpack.c.h.b16 %v118
  %v152 = vunpack.c.l.b16 %v119
  %v153 = vunpack.c.h.b16 %v119
  %v154 = vunpack.c.l.b16 %v120
  %v155 = vunpack.c.h.b16 %v120
  %v156 = vunpack.c.l.b16 %v121
  %v157 = vunpack.c.h.b16 %v121
  %v158 = vpack.c.b16 %v144, %v142
  %v159 = vpack.c.b16 %v145, %v143
  %v160 = vpack.c.b16 %v148, %v146
  %v161 = vpack.c.b16 %v149, %v147
  %v162 = vpack.c.b16 %v152, %v150
  %v163 = vpack.c.b16 %v153, %v151
  %v164 = vpack.c.b16 %v156, %v154
  %v165 = vpack.c.b16 %v157, %v155
  %vm174 = vcmask 523264
  %v176 = vsel %vm174, %v82, 0
  %v179 = vsel %vm174, %v83, 0
  %v182 = vsel %vm174, %v84, 0
  %v185 = vsel %vm174, %v85, 0
  %v188 = vsel %vm174, %v86, 0
  %v191 = vsel %vm174, %v87, 0
  %v194 = vsel %vm174, %v88, 0
  %v197 = vsel %vm174, %v89, 0
  %v200 = vsel %vm174, %v90, 0
  %v203 = vsel %vm174, %v91, 0
  %v206 = vsel %vm174, %v92, 0
  %v209 = vsel %vm174, %v93, 0
  %v212 = vsel %vm174, %v94, 0
  %v215 = vsel %vm174, %v95, 0
  %v218 = vsel %vm174, %v96, 0
  %v221 = vsel %vm174, %v97, 0
  %v224 = vsel %vm174, %v98, 0
  %v227 = vsel %vm174, %v99, 0
  %v230 = vsel %vm174, %v100, 0
  %v233 = vsel %vm174, %v101, 0
  %v236 = vsel %vm174, %v102, 0
  %v239 = vsel %vm174, %v103, 0
  %v242 = vsel %vm174, %v104, 0
  %v245 = vsel %vm174, %v105, 0
  %v248 = vsel %vm174, %v106, 0
  %v251 = vsel %vm174, %v107, 0
  %v254 = vsel %vm174, %v108, 0
  %v257 = vsel %vm174, %v109, 0
  %v260 = vsel %vm174, %v110, 0
  %v263 = vsel %vm174, %v111, 0
  %v266 = vsel %vm174, %v112, 0
  %v269 = vsel %vm174, %v113, 0
  %271 = vmatprep.subr.bf16.mxu0 0
  %272 = vmatpush1.bf16.msra.mxu0 0
  %273 = vmatprep.subr.bf16.mxu0 0
  %274 = vmatpush1.bf16.msra.mxu0 0
  %275 = vmatprep.subr.bf16.mxu0 0
  %276 = vmatpush1.bf16.msra.mxu0 0
  %277 = vmatprep.subr.bf16.mxu0 0
  %278 = vmatpush1.bf16.msra.mxu0 0
  %279 = vmatprep.subr.bf16.mxu0 %v165
  %280 = vmatpush1.bf16.msra.mxu0 %v164
  %281 = vmatprep.subr.bf16.mxu0 %v163
  %282 = vmatpush1.bf16.msra.mxu0 %v162
  %283 = vmatprep.subr.bf16.mxu0 %v161
  %284 = vmatpush1.bf16.msra.mxu0 %v160
  %285 = vmatprep.subr.bf16.mxu0 %v159
  %286 = vmatpush1.bf16.msra.mxu0 %v158
  %287 = vmatprep.subr.bf16.mxu0 0
  %288 = vmatpush2.bf16.msra.mxu0 0
  %289 = vmatprep.subr.bf16.mxu0 0
  %290 = vmatpush2.bf16.msra.mxu0 0
  %291 = vmatprep.subr.bf16.mxu0 0
  %292 = vmatpush2.bf16.msra.mxu0 0
  %293 = vmatprep.subr.bf16.mxu0 0
  %294 = vmatpush2.bf16.msra.mxu0 0
  %295 = vmatprep.subr.bf16.mxu0 0
  %296 = vmatpush2.bf16.msra.mxu0 0
  %297 = vmatprep.subr.bf16.mxu0 0
  %298 = vmatpush2.bf16.msra.mxu0 0
  %299 = vmatprep.subr.bf16.mxu0 0
  %300 = vmatpush2.bf16.msra.mxu0 0
  %301 = vmatprep.subr.bf16.mxu0 0
  %302 = vmatpush2.bf16.msra.mxu0 0
  %303 = vmatprep.mubr.bf16.mxu0 0
  %304 = vmatmul.mubr.bf16.gmra.mxu0 %v176
  %v305 = vpop.f32.mrf.mxu0
  %v306 = vadd.f32 %v127, %v305
  %v307 = vpop.f32.mrf.mxu0
  %v308 = vadd.f32 %v131, %v307
  %v309 = vpop.f32.mrf.mxu0
  %v310 = vadd.f32 %v127, %v309
  %v311 = vpop.f32.mrf.mxu0
  %v312 = vadd.f32 %v131, %v311
  %313 = vmatprep.mubr.bf16.mxu0 0
  %314 = vmatmul.mubr.bf16.gmra.mxu0 %v179
  %v315 = vpop.f32.mrf.mxu0
  %v316 = vadd.f32 %v127, %v315
  %v317 = vpop.f32.mrf.mxu0
  %v318 = vadd.f32 %v131, %v317
  %v319 = vpop.f32.mrf.mxu0
  %v320 = vadd.f32 %v127, %v319
  %v321 = vpop.f32.mrf.mxu0
  %v322 = vadd.f32 %v131, %v321
  %323 = vmatprep.mubr.bf16.mxu0 0
  %324 = vmatmul.mubr.bf16.gmra.mxu0 %v182
  %v325 = vpop.f32.mrf.mxu0
  %v326 = vadd.f32 %v127, %v325
  %v327 = vpop.f32.mrf.mxu0
  %v328 = vadd.f32 %v131, %v327
  %v329 = vpop.f32.mrf.mxu0
  %v330 = vadd.f32 %v127, %v329
  %v331 = vpop.f32.mrf.mxu0
  %v332 = vadd.f32 %v131, %v331
  %333 = vmatprep.mubr.bf16.mxu0 0
  %334 = vmatmul.mubr.bf16.gmra.mxu0 %v185
  %v335 = vpop.f32.mrf.mxu0
  %v336 = vadd.f32 %v127, %v335
  %v337 = vpop.f32.mrf.mxu0
  %v338 = vadd.f32 %v131, %v337
  %v339 = vpop.f32.mrf.mxu0
  %v340 = vadd.f32 %v127, %v339
  %v341 = vpop.f32.mrf.mxu0
  %v342 = vadd.f32 %v131, %v341
  %343 = vmatprep.mubr.bf16.mxu0 0
  %344 = vmatmul.mubr.bf16.gmra.mxu0 %v188
  %v345 = vpop.f32.mrf.mxu0
  %v346 = vadd.f32 %v127, %v345
  %v347 = vpop.f32.mrf.mxu0
  %v348 = vadd.f32 %v131, %v347
  %v349 = vpop.f32.mrf.mxu0
  %v350 = vadd.f32 %v127, %v349
  %v351 = vpop.f32.mrf.mxu0
  %v352 = vadd.f32 %v131, %v351
  %353 = vmatprep.mubr.bf16.mxu0 0
  %354 = vmatmul.mubr.bf16.gmra.mxu0 %v191
  %v355 = vpop.f32.mrf.mxu0
  %v356 = vadd.f32 %v127, %v355
  %v357 = vpop.f32.mrf.mxu0
  %v358 = vadd.f32 %v131, %v357
  %v359 = vpop.f32.mrf.mxu0
  %v360 = vadd.f32 %v127, %v359
  %v361 = vpop.f32.mrf.mxu0
  %v362 = vadd.f32 %v131, %v361
  %363 = vmatprep.mubr.bf16.mxu0 0
  %364 = vmatmul.mubr.bf16.gmra.mxu0 %v194
  %v365 = vpop.f32.mrf.mxu0
  %v366 = vadd.f32 %v127, %v365
  %v367 = vpop.f32.mrf.mxu0
  %v368 = vadd.f32 %v131, %v367
  %v369 = vpop.f32.mrf.mxu0
  %v370 = vadd.f32 %v127, %v369
  %v371 = vpop.f32.mrf.mxu0
  %v372 = vadd.f32 %v131, %v371
  %373 = vmatprep.mubr.bf16.mxu0 0
  %374 = vmatmul.mubr.bf16.gmra.mxu0 %v197
  %v375 = vpop.f32.mrf.mxu0
  %v376 = vadd.f32 %v127, %v375
  %v377 = vpop.f32.mrf.mxu0
  %v378 = vadd.f32 %v131, %v377
  %v379 = vpop.f32.mrf.mxu0
  %v380 = vadd.f32 %v127, %v379
  %v381 = vpop.f32.mrf.mxu0
  %v382 = vadd.f32 %v131, %v381
  %383 = vmatprep.mubr.bf16.mxu0 0
  %384 = vmatmul.mubr.bf16.gmra.mxu0 %v200
  %v385 = vpop.f32.mrf.mxu0
  %v386 = vadd.f32 %v127, %v385
  %v387 = vpop.f32.mrf.mxu0
  %v388 = vadd.f32 %v131, %v387
  %v389 = vpop.f32.mrf.mxu0
  %v390 = vadd.f32 %v127, %v389
  %v391 = vpop.f32.mrf.mxu0
  %v392 = vadd.f32 %v131, %v391
  %393 = vmatprep.mubr.bf16.mxu0 0
  %394 = vmatmul.mubr.bf16.gmra.mxu0 %v203
  %v395 = vpop.f32.mrf.mxu0
  %v396 = vadd.f32 %v127, %v395
  %v397 = vpop.f32.mrf.mxu0
  %v398 = vadd.f32 %v131, %v397
  %v399 = vpop.f32.mrf.mxu0
  %v400 = vadd.f32 %v127, %v399
  %v401 = vpop.f32.mrf.mxu0
  %v402 = vadd.f32 %v131, %v401
  %403 = vmatprep.mubr.bf16.mxu0 0
  %404 = vmatmul.mubr.bf16.gmra.mxu0 %v206
  %v405 = vpop.f32.mrf.mxu0
  %v406 = vadd.f32 %v127, %v405
  %v407 = vpop.f32.mrf.mxu0
  %v408 = vadd.f32 %v131, %v407
  %v409 = vpop.f32.mrf.mxu0
  %v410 = vadd.f32 %v127, %v409
  %v411 = vpop.f32.mrf.mxu0
  %v412 = vadd.f32 %v131, %v411
  %413 = vmatprep.mubr.bf16.mxu0 0
  %414 = vmatmul.mubr.bf16.gmra.mxu0 %v209
  %v415 = vpop.f32.mrf.mxu0
  %v416 = vadd.f32 %v127, %v415
  %v417 = vpop.f32.mrf.mxu0
  %v418 = vadd.f32 %v131, %v417
  %v419 = vpop.f32.mrf.mxu0
  %v420 = vadd.f32 %v127, %v419
  %v421 = vpop.f32.mrf.mxu0
  %v422 = vadd.f32 %v131, %v421
  %423 = vmatprep.mubr.bf16.mxu0 0
  %424 = vmatmul.mubr.bf16.gmra.mxu0 %v212
  %v425 = vpop.f32.mrf.mxu0
  %v426 = vadd.f32 %v127, %v425
  %v427 = vpop.f32.mrf.mxu0
  %v428 = vadd.f32 %v131, %v427
  %v429 = vpop.f32.mrf.mxu0
  %v430 = vadd.f32 %v127, %v429
  %v431 = vpop.f32.mrf.mxu0
  %v432 = vadd.f32 %v131, %v431
  %433 = vmatprep.mubr.bf16.mxu0 0
  %434 = vmatmul.mubr.bf16.gmra.mxu0 %v215
  %v435 = vpop.f32.mrf.mxu0
  %v436 = vadd.f32 %v127, %v435
  %v437 = vpop.f32.mrf.mxu0
  %v438 = vadd.f32 %v131, %v437
  %v439 = vpop.f32.mrf.mxu0
  %v440 = vadd.f32 %v127, %v439
  %v441 = vpop.f32.mrf.mxu0
  %v442 = vadd.f32 %v131, %v441
  %443 = vmatprep.mubr.bf16.mxu0 0
  %444 = vmatmul.mubr.bf16.gmra.mxu0 %v218
  %v445 = vpop.f32.mrf.mxu0
  %v446 = vadd.f32 %v127, %v445
  %v447 = vpop.f32.mrf.mxu0
  %v448 = vadd.f32 %v131, %v447
  %v449 = vpop.f32.mrf.mxu0
  %v450 = vadd.f32 %v127, %v449
  %v451 = vpop.f32.mrf.mxu0
  %v452 = vadd.f32 %v131, %v451
  %453 = vmatprep.mubr.bf16.mxu0 0
  %454 = vmatmul.mubr.bf16.gmra.mxu0 %v221
  %v455 = vpop.f32.mrf.mxu0
  %v456 = vadd.f32 %v127, %v455
  %v457 = vpop.f32.mrf.mxu0
  %v458 = vadd.f32 %v131, %v457
  %v459 = vpop.f32.mrf.mxu0
  %v460 = vadd.f32 %v127, %v459
  %v461 = vpop.f32.mrf.mxu0
  %v462 = vadd.f32 %v131, %v461
  %463 = vmatprep.mubr.bf16.mxu0 0
  %464 = vmatmul.mubr.bf16.gmra.mxu0 %v224
  %v465 = vpop.f32.mrf.mxu0
  %v466 = vadd.f32 %v127, %v465
  %v467 = vpop.f32.mrf.mxu0
  %v468 = vadd.f32 %v131, %v467
  %v469 = vpop.f32.mrf.mxu0
  %v470 = vadd.f32 %v127, %v469
  %v471 = vpop.f32.mrf.mxu0
  %v472 = vadd.f32 %v131, %v471
  %473 = vmatprep.mubr.bf16.mxu0 0
  %474 = vmatmul.mubr.bf16.gmra.mxu0 %v227
  %v475 = vpop.f32.mrf.mxu0
  %v476 = vadd.f32 %v127, %v475
  %v477 = vpop.f32.mrf.mxu0
  %v478 = vadd.f32 %v131, %v477
  %v479 = vpop.f32.mrf.mxu0
  %v480 = vadd.f32 %v127, %v479
  %v481 = vpop.f32.mrf.mxu0
  %v482 = vadd.f32 %v131, %v481
  %483 = vmatprep.mubr.bf16.mxu0 0
  %484 = vmatmul.mubr.bf16.gmra.mxu0 %v230
  %v485 = vpop.f32.mrf.mxu0
  %v486 = vadd.f32 %v127, %v485
  %v487 = vpop.f32.mrf.mxu0
  %v488 = vadd.f32 %v131, %v487
  %v489 = vpop.f32.mrf.mxu0
  %v490 = vadd.f32 %v127, %v489
  %v491 = vpop.f32.mrf.mxu0
  %v492 = vadd.f32 %v131, %v491
  %493 = vmatprep.mubr.bf16.mxu0 0
  %494 = vmatmul.mubr.bf16.gmra.mxu0 %v233
  %v495 = vpop.f32.mrf.mxu0
  %v496 = vadd.f32 %v127, %v495
  %v497 = vpop.f32.mrf.mxu0
  %v498 = vadd.f32 %v131, %v497
  %v499 = vpop.f32.mrf.mxu0
  %v500 = vadd.f32 %v127, %v499
  %v501 = vpop.f32.mrf.mxu0
  %v502 = vadd.f32 %v131, %v501
  %503 = vmatprep.mubr.bf16.mxu0 0
  %504 = vmatmul.mubr.bf16.gmra.mxu0 %v236
  %v505 = vpop.f32.mrf.mxu0
  %v506 = vadd.f32 %v127, %v505
  %v507 = vpop.f32.mrf.mxu0
  %v508 = vadd.f32 %v131, %v507
  %v509 = vpop.f32.mrf.mxu0
  %v510 = vadd.f32 %v127, %v509
  %v511 = vpop.f32.mrf.mxu0
  %v512 = vadd.f32 %v131, %v511
  %513 = vmatprep.mubr.bf16.mxu0 0
  %514 = vmatmul.mubr.bf16.gmra.mxu0 %v239
  %v515 = vpop.f32.mrf.mxu0
  %v516 = vadd.f32 %v127, %v515
  %v517 = vpop.f32.mrf.mxu0
  %v518 = vadd.f32 %v131, %v517
  %v519 = vpop.f32.mrf.mxu0
  %v520 = vadd.f32 %v127, %v519
  %v521 = vpop.f32.mrf.mxu0
  %v522 = vadd.f32 %v131, %v521
  %523 = vmatprep.mubr.bf16.mxu0 0
  %524 = vmatmul.mubr.bf16.gmra.mxu0 %v242
  %v525 = vpop.f32.mrf.mxu0
  %v526 = vadd.f32 %v127, %v525
  %v527 = vpop.f32.mrf.mxu0
  %v528 = vadd.f32 %v131, %v527
  %v529 = vpop.f32.mrf.mxu0
  %v530 = vadd.f32 %v127, %v529
  %v531 = vpop.f32.mrf.mxu0
  %v532 = vadd.f32 %v131, %v531
  %533 = vmatprep.mubr.bf16.mxu0 0
  %534 = vmatmul.mubr.bf16.gmra.mxu0 %v245
  %v535 = vpop.f32.mrf.mxu0
  %v536 = vadd.f32 %v127, %v535
  %v537 = vpop.f32.mrf.mxu0
  %v538 = vadd.f32 %v131, %v537
  %v539 = vpop.f32.mrf.mxu0
  %v540 = vadd.f32 %v127, %v539
  %v541 = vpop.f32.mrf.mxu0
  %v542 = vadd.f32 %v131, %v541
  %543 = vmatprep.mubr.bf16.mxu0 0
  %544 = vmatmul.mubr.bf16.gmra.mxu0 %v248
  %v545 = vpop.f32.mrf.mxu0
  %v546 = vadd.f32 %v127, %v545
  %v547 = vpop.f32.mrf.mxu0
  %v548 = vadd.f32 %v131, %v547
  %v549 = vpop.f32.mrf.mxu0
  %v550 = vadd.f32 %v127, %v549
  %v551 = vpop.f32.mrf.mxu0
  %v552 = vadd.f32 %v131, %v551
  %553 = vmatprep.mubr.bf16.mxu0 0
  %554 = vmatmul.mubr.bf16.gmra.mxu0 %v251
  %v555 = vpop.f32.mrf.mxu0
  %v556 = vadd.f32 %v127, %v555
  %v557 = vpop.f32.mrf.mxu0
  %v558 = vadd.f32 %v131, %v557
  %v559 = vpop.f32.mrf.mxu0
  %v560 = vadd.f32 %v127, %v559
  %v561 = vpop.f32.mrf.mxu0
  %v562 = vadd.f32 %v131, %v561
  %563 = vmatprep.mubr.bf16.mxu0 0
  %564 = vmatmul.mubr.bf16.gmra.mxu0 %v254
  %v565 = vpop.f32.mrf.mxu0
  %v566 = vadd.f32 %v127, %v565
  %v567 = vpop.f32.mrf.mxu0
  %v568 = vadd.f32 %v131, %v567
  %v569 = vpop.f32.mrf.mxu0
  %v570 = vadd.f32 %v127, %v569
  %v571 = vpop.f32.mrf.mxu0
  %v572 = vadd.f32 %v131, %v571
  %573 = vmatprep.mubr.bf16.mxu0 0
  %574 = vmatmul.mubr.bf16.gmra.mxu0 %v257
  %v575 = vpop.f32.mrf.mxu0
  %v576 = vadd.f32 %v127, %v575
  %v577 = vpop.f32.mrf.mxu0
  %v578 = vadd.f32 %v131, %v577
  %v579 = vpop.f32.mrf.mxu0
  %v580 = vadd.f32 %v127, %v579
  %v581 = vpop.f32.mrf.mxu0
  %v582 = vadd.f32 %v131, %v581
  %583 = vmatprep.mubr.bf16.mxu0 0
  %584 = vmatmul.mubr.bf16.gmra.mxu0 %v260
  %v585 = vpop.f32.mrf.mxu0
  %v586 = vadd.f32 %v127, %v585
  %v587 = vpop.f32.mrf.mxu0
  %v588 = vadd.f32 %v131, %v587
  %v589 = vpop.f32.mrf.mxu0
  %v590 = vadd.f32 %v127, %v589
  %v591 = vpop.f32.mrf.mxu0
  %v592 = vadd.f32 %v131, %v591
  %593 = vmatprep.mubr.bf16.mxu0 0
  %594 = vmatmul.mubr.bf16.gmra.mxu0 %v263
  %v595 = vpop.f32.mrf.mxu0
  %v596 = vadd.f32 %v127, %v595
  %v597 = vpop.f32.mrf.mxu0
  %v598 = vadd.f32 %v131, %v597
  %v599 = vpop.f32.mrf.mxu0
  %v600 = vadd.f32 %v127, %v599
  %v601 = vpop.f32.mrf.mxu0
  %v602 = vadd.f32 %v131, %v601
  %603 = vmatprep.mubr.bf16.mxu0 0
  %604 = vmatmul.mubr.bf16.gmra.mxu0 %v266
  %v605 = vpop.f32.mrf.mxu0
  %v606 = vadd.f32 %v127, %v605
  %v607 = vpop.f32.mrf.mxu0
  %v608 = vadd.f32 %v131, %v607
  %v609 = vpop.f32.mrf.mxu0
  %v610 = vadd.f32 %v127, %v609
  %v611 = vpop.f32.mrf.mxu0
  %v612 = vadd.f32 %v131, %v611
  %613 = vmatprep.mubr.bf16.mxu0 0
  %614 = vmatmul.mubr.bf16.gmra.mxu0 %v269
  %v615 = vpop.f32.mrf.mxu0
  %v616 = vadd.f32 %v127, %v615
  %v617 = vpop.f32.mrf.mxu0
  %v618 = vadd.f32 %v131, %v617
  %v619 = vpop.f32.mrf.mxu0
  %v620 = vadd.f32 %v127, %v619
  %v621 = vpop.f32.mrf.mxu0
  %v622 = vadd.f32 %v131, %v621
  %623 = vdwg.mxu0
  %v624 = vpack.c.bf16 %v310, %v306
  %v625 = vpack.c.bf16 %v320, %v316
  %v626 = vpack.c.bf16 %v330, %v326
  %v627 = vpack.c.bf16 %v340, %v336
  %v628 = vpack.c.bf16 %v350, %v346
  %v629 = vpack.c.bf16 %v360, %v356
  %v630 = vpack.c.bf16 %v370, %v366
  %v631 = vpack.c.bf16 %v380, %v376
  %v632 = vpack.c.bf16 %v390, %v386
  %v633 = vpack.c.bf16 %v400, %v396
  %v634 = vpack.c.bf16 %v410, %v406
  %v635 = vpack.c.bf16 %v420, %v416
  %v636 = vpack.c.bf16 %v430, %v426
  %v637 = vpack.c.bf16 %v440, %v436
  %v638 = vpack.c.bf16 %v450, %v446
  %v639 = vpack.c.bf16 %v460, %v456
  %v640 = vpack.c.bf16 %v470, %v466
  %v641 = vpack.c.bf16 %v480, %v476
  %v642 = vpack.c.bf16 %v490, %v486
  %v643 = vpack.c.bf16 %v500, %v496
  %v644 = vpack.c.bf16 %v510, %v506
  %v645 = vpack.c.bf16 %v520, %v516
  %v646 = vpack.c.bf16 %v530, %v526
  %v647 = vpack.c.bf16 %v540, %v536
  %v648 = vpack.c.bf16 %v550, %v546
  %v649 = vpack.c.bf16 %v560, %v556
  %v650 = vpack.c.bf16 %v570, %v566
  %v651 = vpack.c.bf16 %v580, %v576
  %v652 = vpack.c.bf16 %v590, %v586
  %v653 = vpack.c.bf16 %v600, %v596
  %v654 = vpack.c.bf16 %v610, %v606
  %v655 = vpack.c.bf16 %v620, %v616
  %v688 = vunpack.c.l.b16 %v624
  %v689 = vunpack.c.h.b16 %v624
  %v690 = vunpack.c.l.b16 %v625
  %v691 = vunpack.c.h.b16 %v625
  %v692 = vunpack.c.l.b16 %v626
  %v693 = vunpack.c.h.b16 %v626
  %v694 = vunpack.c.l.b16 %v627
  %v695 = vunpack.c.h.b16 %v627
  %v696 = vunpack.c.l.b16 %v628
  %v697 = vunpack.c.h.b16 %v628
  %v698 = vunpack.c.l.b16 %v629
  %v699 = vunpack.c.h.b16 %v629
  %v700 = vunpack.c.l.b16 %v630
  %v701 = vunpack.c.h.b16 %v630
  %v702 = vunpack.c.l.b16 %v631
  %v703 = vunpack.c.h.b16 %v631
  %v704 = vunpack.c.l.b16 %v632
  %v705 = vunpack.c.h.b16 %v632
  %v706 = vunpack.c.l.b16 %v633
  %v707 = vunpack.c.h.b16 %v633
  %v708 = vunpack.c.l.b16 %v634
  %v709 = vunpack.c.h.b16 %v634
  %v710 = vunpack.c.l.b16 %v635
  %v711 = vunpack.c.h.b16 %v635
  %v712 = vunpack.c.l.b16 %v636
  %v713 = vunpack.c.h.b16 %v636
  %v714 = vunpack.c.l.b16 %v637
  %v715 = vunpack.c.h.b16 %v637
  %v716 = vunpack.c.l.b16 %v638
  %v717 = vunpack.c.h.b16 %v638
  %v718 = vunpack.c.l.b16 %v639
  %v719 = vunpack.c.h.b16 %v639
  %v720 = vunpack.c.l.b16 %v640
  %v721 = vunpack.c.h.b16 %v640
  %v722 = vunpack.c.l.b16 %v641
  %v723 = vunpack.c.h.b16 %v641
  %v724 = vunpack.c.l.b16 %v642
  %v725 = vunpack.c.h.b16 %v642
  %v726 = vunpack.c.l.b16 %v643
  %v727 = vunpack.c.h.b16 %v643
  %v728 = vunpack.c.l.b16 %v644
  %v729 = vunpack.c.h.b16 %v644
  %v730 = vunpack.c.l.b16 %v645
  %v731 = vunpack.c.h.b16 %v645
  %v732 = vunpack.c.l.b16 %v646
  %v733 = vunpack.c.h.b16 %v646
  %v734 = vunpack.c.l.b16 %v647
  %v735 = vunpack.c.h.b16 %v647
  %v736 = vunpack.c.l.b16 %v648
  %v737 = vunpack.c.h.b16 %v648
  %v738 = vunpack.c.l.b16 %v649
  %v739 = vunpack.c.h.b16 %v649
  %v740 = vunpack.c.l.b16 %v650
  %v741 = vunpack.c.h.b16 %v650
  %v742 = vunpack.c.l.b16 %v651
  %v743 = vunpack.c.h.b16 %v651
  %v744 = vunpack.c.l.b16 %v652
  %v745 = vunpack.c.h.b16 %v652
  %v746 = vunpack.c.l.b16 %v653
  %v747 = vunpack.c.h.b16 %v653
  %v748 = vunpack.c.l.b16 %v654
  %v749 = vunpack.c.h.b16 %v654
  %v750 = vunpack.c.l.b16 %v655
  %v751 = vunpack.c.h.b16 %v655
  %v752 = vpack.c.b16 %v688, %v688
  %v753 = vpack.c.b16 %v689, %v689
  %v754 = vpack.c.b16 %v690, %v690
  %v755 = vpack.c.b16 %v691, %v691
  %v756 = vpack.c.b16 %v692, %v692
  %v757 = vpack.c.b16 %v693, %v693
  %v758 = vpack.c.b16 %v694, %v694
  %v759 = vpack.c.b16 %v695, %v695
  %v760 = vpack.c.b16 %v696, %v696
  %v761 = vpack.c.b16 %v697, %v697
  %v762 = vpack.c.b16 %v698, %v698
  %v763 = vpack.c.b16 %v699, %v699
  %v764 = vpack.c.b16 %v700, %v700
  %v765 = vpack.c.b16 %v701, %v701
  %v766 = vpack.c.b16 %v702, %v702
  %v767 = vpack.c.b16 %v703, %v703
  %v768 = vpack.c.b16 %v704, %v704
  %v769 = vpack.c.b16 %v705, %v705
  %v770 = vpack.c.b16 %v706, %v706
  %v771 = vpack.c.b16 %v707, %v707
  %v772 = vpack.c.b16 %v708, %v708
  %v773 = vpack.c.b16 %v709, %v709
  %v774 = vpack.c.b16 %v710, %v710
  %v775 = vpack.c.b16 %v711, %v711
  %v776 = vpack.c.b16 %v712, %v712
  %v777 = vpack.c.b16 %v713, %v713
  %v778 = vpack.c.b16 %v714, %v714
  %v779 = vpack.c.b16 %v715, %v715
  %v780 = vpack.c.b16 %v716, %v716
  %v781 = vpack.c.b16 %v717, %v717
  %v782 = vpack.c.b16 %v718, %v718
  %v783 = vpack.c.b16 %v719, %v719
  %v784 = vpack.c.b16 %v720, %v720
  %v785 = vpack.c.b16 %v721, %v721
  %v786 = vpack.c.b16 %v722, %v722
  %v787 = vpack.c.b16 %v723, %v723
  %v788 = vpack.c.b16 %v724, %v724
  %v789 = vpack.c.b16 %v725, %v725
  %v790 = vpack.c.b16 %v726, %v726
  %v791 = vpack.c.b16 %v727, %v727
  %v792 = vpack.c.b16 %v728, %v728
  %v793 = vpack.c.b16 %v729, %v729
  %v794 = vpack.c.b16 %v730, %v730
  %v795 = vpack.c.b16 %v731, %v731
  %v796 = vpack.c.b16 %v732, %v732
  %v797 = vpack.c.b16 %v733, %v733
  %v798 = vpack.c.b16 %v734, %v734
  %v799 = vpack.c.b16 %v735, %v735
  %v800 = vpack.c.b16 %v736, %v736
  %v801 = vpack.c.b16 %v737, %v737
  %v802 = vpack.c.b16 %v738, %v738
  %v803 = vpack.c.b16 %v739, %v739
  %v804 = vpack.c.b16 %v740, %v740
  %v805 = vpack.c.b16 %v741, %v741
  %v806 = vpack.c.b16 %v742, %v742
  %v807 = vpack.c.b16 %v743, %v743
  %v808 = vpack.c.b16 %v744, %v744
  %v809 = vpack.c.b16 %v745, %v745
  %v810 = vpack.c.b16 %v746, %v746
  %v811 = vpack.c.b16 %v747, %v747
  %v812 = vpack.c.b16 %v748, %v748
  %v813 = vpack.c.b16 %v749, %v749
  %v814 = vpack.c.b16 %v750, %v750
  %v815 = vpack.c.b16 %v751, %v751
  %vm880 = vcmask 519168
  %881 = vst.msk [vmem:[%s3] sm:$0xf] %vm880, %v752
  %882 = vst.msk [vmem:[%s3 + $0x4] sm:$0xf] %vm880, %v753
  %883 = vst.msk [vmem:[%s3 + $0x8] sm:$0xf] %vm880, %v754
  %884 = vst.msk [vmem:[%s3 + $0xc] sm:$0xf] %vm880, %v755
  %885 = vst.msk [vmem:[%s3 + $0x10] sm:$0xf] %vm880, %v756
  %886 = vst.msk [vmem:[%s3 + $0x14] sm:$0xf] %vm880, %v757
  %887 = vst.msk [vmem:[%s3 + $0x18] sm:$0xf] %vm880, %v758
  %888 = vst.msk [vmem:[%s3 + $0x1c] sm:$0xf] %vm880, %v759
  %889 = vst.msk [vmem:[%s3 + $0x20] sm:$0xf] %vm880, %v760
  %890 = vst.msk [vmem:[%s3 + $0x24] sm:$0xf] %vm880, %v761
  %891 = vst.msk [vmem:[%s3 + $0x28] sm:$0xf] %vm880, %v762
  %892 = vst.msk [vmem:[%s3 + $0x2c] sm:$0xf] %vm880, %v763
  %893 = vst.msk [vmem:[%s3 + $0x30] sm:$0xf] %vm880, %v764
  %894 = vst.msk [vmem:[%s3 + $0x34] sm:$0xf] %vm880, %v765
  %895 = vst.msk [vmem:[%s3 + $0x38] sm:$0xf] %vm880, %v766
  %896 = vst.msk [vmem:[%s3 + $0x3c] sm:$0xf] %vm880, %v767
  %897 = vst.msk [vmem:[%s3 + $0x40] sm:$0xf] %vm880, %v768
  %898 = vst.msk [vmem:[%s3 + $0x44] sm:$0xf] %vm880, %v769
  %899 = vst.msk [vmem:[%s3 + $0x48] sm:$0xf] %vm880, %v770
  %900 = vst.msk [vmem:[%s3 + $0x4c] sm:$0xf] %vm880, %v771
  %901 = vst.msk [vmem:[%s3 + $0x50] sm:$0xf] %vm880, %v772
  %902 = vst.msk [vmem:[%s3 + $0x54] sm:$0xf] %vm880, %v773
  %903 = vst.msk [vmem:[%s3 + $0x58] sm:$0xf] %vm880, %v774
  %904 = vst.msk [vmem:[%s3 + $0x5c] sm:$0xf] %vm880, %v775
  %905 = vst.msk [vmem:[%s3 + $0x60] sm:$0xf] %vm880, %v776
  %906 = vst.msk [vmem:[%s3 + $0x64] sm:$0xf] %vm880, %v777
  %907 = vst.msk [vmem:[%s3 + $0x68] sm:$0xf] %vm880, %v778
  %908 = vst.msk [vmem:[%s3 + $0x6c] sm:$0xf] %vm880, %v779
  %909 = vst.msk [vmem:[%s3 + $0x70] sm:$0xf] %vm880, %v780
  %910 = vst.msk [vmem:[%s3 + $0x74] sm:$0xf] %vm880, %v781
  %911 = vst.msk [vmem:[%s3 + $0x78] sm:$0xf] %vm880, %v782
  %912 = vst.msk [vmem:[%s3 + $0x7c] sm:$0xf] %vm880, %v783
  %913 = vst.msk [vmem:[%s3 + $0x80] sm:$0xf] %vm880, %v784
  %914 = vst.msk [vmem:[%s3 + $0x84] sm:$0xf] %vm880, %v785
  %915 = vst.msk [vmem:[%s3 + $0x88] sm:$0xf] %vm880, %v786
  %916 = vst.msk [vmem:[%s3 + $0x8c] sm:$0xf] %vm880, %v787
  %917 = vst.msk [vmem:[%s3 + $0x90] sm:$0xf] %vm880, %v788
  %918 = vst.msk [vmem:[%s3 + $0x94] sm:$0xf] %vm880, %v789
  %919 = vst.msk [vmem:[%s3 + $0x98] sm:$0xf] %vm880, %v790
  %920 = vst.msk [vmem:[%s3 + $0x9c] sm:$0xf] %vm880, %v791
  %921 = vst.msk [vmem:[%s3 + $0xa0] sm:$0xf] %vm880, %v792
  %922 = vst.msk [vmem:[%s3 + $0xa4] sm:$0xf] %vm880, %v793
  %923 = vst.msk [vmem:[%s3 + $0xa8] sm:$0xf] %vm880, %v794
  %924 = vst.msk [vmem:[%s3 + $0xac] sm:$0xf] %vm880, %v795
  %925 = vst.msk [vmem:[%s3 + $0xb0] sm:$0xf] %vm880, %v796
  %926 = vst.msk [vmem:[%s3 + $0xb4] sm:$0xf] %vm880, %v797
  %927 = vst.msk [vmem:[%s3 + $0xb8] sm:$0xf] %vm880, %v798
  %928 = vst.msk [vmem:[%s3 + $0xbc] sm:$0xf] %vm880, %v799
  %929 = vst.msk [vmem:[%s3 + $0xc0] sm:$0xf] %vm880, %v800
  %930 = vst.msk [vmem:[%s3 + $0xc4] sm:$0xf] %vm880, %v801
  %931 = vst.msk [vmem:[%s3 + $0xc8] sm:$0xf] %vm880, %v802
  %932 = vst.msk [vmem:[%s3 + $0xcc] sm:$0xf] %vm880, %v803
  %933 = vst.msk [vmem:[%s3 + $0xd0] sm:$0xf] %vm880, %v804
  %934 = vst.msk [vmem:[%s3 + $0xd4] sm:$0xf] %vm880, %v805
  %935 = vst.msk [vmem:[%s3 + $0xd8] sm:$0xf] %vm880, %v806
  %936 = vst.msk [vmem:[%s3 + $0xdc] sm:$0xf] %vm880, %v807
  %937 = vst.msk [vmem:[%s3 + $0xe0] sm:$0xf] %vm880, %v808
  %938 = vst.msk [vmem:[%s3 + $0xe4] sm:$0xf] %vm880, %v809
  %939 = vst.msk [vmem:[%s3 + $0xe8] sm:$0xf] %vm880, %v810
  %940 = vst.msk [vmem:[%s3 + $0xec] sm:$0xf] %vm880, %v811
  %941 = vst.msk [vmem:[%s3 + $0xf0] sm:$0xf] %vm880, %v812
  %942 = vst.msk [vmem:[%s3 + $0xf4] sm:$0xf] %vm880, %v813
  %943 = vst.msk [vmem:[%s3 + $0xf8] sm:$0xf] %vm880, %v814
  %944 = vst.msk [vmem:[%s3 + $0xfc] sm:$0xf] %vm880, %v815
  %945 = vrot.lane.b32.xlu0 %v752, 64
  %v946 = vpop.permute.xlu0 %945
  %947 = vrot.lane.b32.xlu0 %v753, 64
  %v948 = vpop.permute.xlu0 %947
  %949 = vrot.lane.b32.xlu0 %v754, 64
  %v950 = vpop.permute.xlu0 %949
  %951 = vrot.lane.b32.xlu0 %v755, 64
  %v952 = vpop.permute.xlu0 %951
  %953 = vrot.lane.b32.xlu0 %v756, 64
  %v954 = vpop.permute.xlu0 %953
  %955 = vrot.lane.b32.xlu0 %v757, 64
  %v956 = vpop.permute.xlu0 %955
  %957 = vrot.lane.b32.xlu0 %v758, 64
  %v958 = vpop.permute.xlu0 %957
  %959 = vrot.lane.b32.xlu0 %v759, 64
  %v960 = vpop.permute.xlu0 %959
  %961 = vrot.lane.b32.xlu0 %v760, 64
  %v962 = vpop.permute.xlu0 %961
  %963 = vrot.lane.b32.xlu0 %v761, 64
  %v964 = vpop.permute.xlu0 %963
  %965 = vrot.lane.b32.xlu0 %v762, 64
  %v966 = vpop.permute.xlu0 %965
  %967 = vrot.lane.b32.xlu0 %v763, 64
  %v968 = vpop.permute.xlu0 %967
  %969 = vrot.lane.b32.xlu0 %v764, 64
  %v970 = vpop.permute.xlu0 %969
  %971 = vrot.lane.b32.xlu0 %v765, 64
  %v972 = vpop.permute.xlu0 %971
  %973 = vrot.lane.b32.xlu0 %v766, 64
  %v974 = vpop.permute.xlu0 %973
  %975 = vrot.lane.b32.xlu0 %v767, 64
  %v976 = vpop.permute.xlu0 %975
  %977 = vrot.lane.b32.xlu0 %v768, 64
  %v978 = vpop.permute.xlu0 %977
  %979 = vrot.lane.b32.xlu0 %v769, 64
  %v980 = vpop.permute.xlu0 %979
  %981 = vrot.lane.b32.xlu0 %v770, 64
  %v982 = vpop.permute.xlu0 %981
  %983 = vrot.lane.b32.xlu0 %v771, 64
  %v984 = vpop.permute.xlu0 %983
  %985 = vrot.lane.b32.xlu0 %v772, 64
  %v986 = vpop.permute.xlu0 %985
  %987 = vrot.lane.b32.xlu0 %v773, 64
  %v988 = vpop.permute.xlu0 %987
  %989 = vrot.lane.b32.xlu0 %v774, 64
  %v990 = vpop.permute.xlu0 %989
  %991 = vrot.lane.b32.xlu0 %v775, 64
  %v992 = vpop.permute.xlu0 %991
  %993 = vrot.lane.b32.xlu0 %v776, 64
  %v994 = vpop.permute.xlu0 %993
  %995 = vrot.lane.b32.xlu0 %v777, 64
  %v996 = vpop.permute.xlu0 %995
  %997 = vrot.lane.b32.xlu0 %v778, 64
  %v998 = vpop.permute.xlu0 %997
  %999 = vrot.lane.b32.xlu0 %v779, 64
  %v1000 = vpop.permute.xlu0 %999
  %1001 = vrot.lane.b32.xlu0 %v780, 64
  %v1002 = vpop.permute.xlu0 %1001
  %1003 = vrot.lane.b32.xlu0 %v781, 64
  %v1004 = vpop.permute.xlu0 %1003
  %1005 = vrot.lane.b32.xlu0 %v782, 64
  %v1006 = vpop.permute.xlu0 %1005
  %1007 = vrot.lane.b32.xlu0 %v783, 64
  %v1008 = vpop.permute.xlu0 %1007
  %1009 = vrot.lane.b32.xlu0 %v784, 64
  %v1010 = vpop.permute.xlu0 %1009
  %1011 = vrot.lane.b32.xlu0 %v785, 64
  %v1012 = vpop.permute.xlu0 %1011
  %1013 = vrot.lane.b32.xlu0 %v786, 64
  %v1014 = vpop.permute.xlu0 %1013
  %1015 = vrot.lane.b32.xlu0 %v787, 64
  %v1016 = vpop.permute.xlu0 %1015
  %1017 = vrot.lane.b32.xlu0 %v788, 64
  %v1018 = vpop.permute.xlu0 %1017
  %1019 = vrot.lane.b32.xlu0 %v789, 64
  %v1020 = vpop.permute.xlu0 %1019
  %1021 = vrot.lane.b32.xlu0 %v790, 64
  %v1022 = vpop.permute.xlu0 %1021
  %1023 = vrot.lane.b32.xlu0 %v791, 64
  %v1024 = vpop.permute.xlu0 %1023
  %1025 = vrot.lane.b32.xlu0 %v792, 64
  %v1026 = vpop.permute.xlu0 %1025
  %1027 = vrot.lane.b32.xlu0 %v793, 64
  %v1028 = vpop.permute.xlu0 %1027
  %1029 = vrot.lane.b32.xlu0 %v794, 64
  %v1030 = vpop.permute.xlu0 %1029
  %1031 = vrot.lane.b32.xlu0 %v795, 64
  %v1032 = vpop.permute.xlu0 %1031
  %1033 = vrot.lane.b32.xlu0 %v796, 64
  %v1034 = vpop.permute.xlu0 %1033
  %1035 = vrot.lane.b32.xlu0 %v797, 64
  %v1036 = vpop.permute.xlu0 %1035
  %1037 = vrot.lane.b32.xlu0 %v798, 64
  %v1038 = vpop.permute.xlu0 %1037
  %1039 = vrot.lane.b32.xlu0 %v799, 64
  %v1040 = vpop.permute.xlu0 %1039
  %1041 = vrot.lane.b32.xlu0 %v800, 64
  %v1042 = vpop.permute.xlu0 %1041
  %1043 = vrot.lane.b32.xlu0 %v801, 64
  %v1044 = vpop.permute.xlu0 %1043
  %1045 = vrot.lane.b32.xlu0 %v802, 64
  %v1046 = vpop.permute.xlu0 %1045
  %1047 = vrot.lane.b32.xlu0 %v803, 64
  %v1048 = vpop.permute.xlu0 %1047
  %1049 = vrot.lane.b32.xlu0 %v804, 64
  %v1050 = vpop.permute.xlu0 %1049
  %1051 = vrot.lane.b32.xlu0 %v805, 64
  %v1052 = vpop.permute.xlu0 %1051
  %1053 = vrot.lane.b32.xlu0 %v806, 64
  %v1054 = vpop.permute.xlu0 %1053
  %1055 = vrot.lane.b32.xlu0 %v807, 64
  %v1056 = vpop.permute.xlu0 %1055
  %1057 = vrot.lane.b32.xlu0 %v808, 64
  %v1058 = vpop.permute.xlu0 %1057
  %1059 = vrot.lane.b32.xlu0 %v809, 64
  %v1060 = vpop.permute.xlu0 %1059
  %1061 = vrot.lane.b32.xlu0 %v810, 64
  %v1062 = vpop.permute.xlu0 %1061
  %1063 = vrot.lane.b32.xlu0 %v811, 64
  %v1064 = vpop.permute.xlu0 %1063
  %1065 = vrot.lane.b32.xlu0 %v812, 64
  %v1066 = vpop.permute.xlu0 %1065
  %1067 = vrot.lane.b32.xlu0 %v813, 64
  %v1068 = vpop.permute.xlu0 %1067
  %1069 = vrot.lane.b32.xlu0 %v814, 64
  %v1070 = vpop.permute.xlu0 %1069
  %1071 = vrot.lane.b32.xlu0 %v815, 64
  %v1072 = vpop.permute.xlu0 %1071
  %1137 = vst.msk [vmem:[%s4] sm:$0xf] %vm880, %v946
  %1138 = vst.msk [vmem:[%s4 + $0x4] sm:$0xf] %vm880, %v948
  %1139 = vst.msk [vmem:[%s4 + $0x8] sm:$0xf] %vm880, %v950
  %1140 = vst.msk [vmem:[%s4 + $0xc] sm:$0xf] %vm880, %v952
  %1141 = vst.msk [vmem:[%s4 + $0x10] sm:$0xf] %vm880, %v954
  %1142 = vst.msk [vmem:[%s4 + $0x14] sm:$0xf] %vm880, %v956
  %1143 = vst.msk [vmem:[%s4 + $0x18] sm:$0xf] %vm880, %v958
  %1144 = vst.msk [vmem:[%s4 + $0x1c] sm:$0xf] %vm880, %v960
  %1145 = vst.msk [vmem:[%s4 + $0x20] sm:$0xf] %vm880, %v962
  %1146 = vst.msk [vmem:[%s4 + $0x24] sm:$0xf] %vm880, %v964
  %1147 = vst.msk [vmem:[%s4 + $0x28] sm:$0xf] %vm880, %v966
  %1148 = vst.msk [vmem:[%s4 + $0x2c] sm:$0xf] %vm880, %v968
  %1149 = vst.msk [vmem:[%s4 + $0x30] sm:$0xf] %vm880, %v970
  %1150 = vst.msk [vmem:[%s4 + $0x34] sm:$0xf] %vm880, %v972
  %1151 = vst.msk [vmem:[%s4 + $0x38] sm:$0xf] %vm880, %v974
  %1152 = vst.msk [vmem:[%s4 + $0x3c] sm:$0xf] %vm880, %v976
  %1153 = vst.msk [vmem:[%s4 + $0x40] sm:$0xf] %vm880, %v978
  %1154 = vst.msk [vmem:[%s4 + $0x44] sm:$0xf] %vm880, %v980
  %1155 = vst.msk [vmem:[%s4 + $0x48] sm:$0xf] %vm880, %v982
  %1156 = vst.msk [vmem:[%s4 + $0x4c] sm:$0xf] %vm880, %v984
  %1157 = vst.msk [vmem:[%s4 + $0x50] sm:$0xf] %vm880, %v986
  %1158 = vst.msk [vmem:[%s4 + $0x54] sm:$0xf] %vm880, %v988
  %1159 = vst.msk [vmem:[%s4 + $0x58] sm:$0xf] %vm880, %v990
  %1160 = vst.msk [vmem:[%s4 + $0x5c] sm:$0xf] %vm880, %v992
  %1161 = vst.msk [vmem:[%s4 + $0x60] sm:$0xf] %vm880, %v994
  %1162 = vst.msk [vmem:[%s4 + $0x64] sm:$0xf] %vm880, %v996
  %1163 = vst.msk [vmem:[%s4 + $0x68] sm:$0xf] %vm880, %v998
  %1164 = vst.msk [vmem:[%s4 + $0x6c] sm:$0xf] %vm880, %v1000
  %1165 = vst.msk [vmem:[%s4 + $0x70] sm:$0xf] %vm880, %v1002
  %1166 = vst.msk [vmem:[%s4 + $0x74] sm:$0xf] %vm880, %v1004
  %1167 = vst.msk [vmem:[%s4 + $0x78] sm:$0xf] %vm880, %v1006
  %1168 = vst.msk [vmem:[%s4 + $0x7c] sm:$0xf] %vm880, %v1008
  %1169 = vst.msk [vmem:[%s4 + $0x80] sm:$0xf] %vm880, %v1010
  %1170 = vst.msk [vmem:[%s4 + $0x84] sm:$0xf] %vm880, %v1012
  %1171 = vst.msk [vmem:[%s4 + $0x88] sm:$0xf] %vm880, %v1014
  %1172 = vst.msk [vmem:[%s4 + $0x8c] sm:$0xf] %vm880, %v1016
  %1173 = vst.msk [vmem:[%s4 + $0x90] sm:$0xf] %vm880, %v1018
  %1174 = vst.msk [vmem:[%s4 + $0x94] sm:$0xf] %vm880, %v1020
  %1175 = vst.msk [vmem:[%s4 + $0x98] sm:$0xf] %vm880, %v1022
  %1176 = vst.msk [vmem:[%s4 + $0x9c] sm:$0xf] %vm880, %v1024
  %1177 = vst.msk [vmem:[%s4 + $0xa0] sm:$0xf] %vm880, %v1026
  %1178 = vst.msk [vmem:[%s4 + $0xa4] sm:$0xf] %vm880, %v1028
  %1179 = vst.msk [vmem:[%s4 + $0xa8] sm:$0xf] %vm880, %v1030
  %1180 = vst.msk [vmem:[%s4 + $0xac] sm:$0xf] %vm880, %v1032
  %1181 = vst.msk [vmem:[%s4 + $0xb0] sm:$0xf] %vm880, %v1034
  %1182 = vst.msk [vmem:[%s4 + $0xb4] sm:$0xf] %vm880, %v1036
  %1183 = vst.msk [vmem:[%s4 + $0xb8] sm:$0xf] %vm880, %v1038
  %1184 = vst.msk [vmem:[%s4 + $0xbc] sm:$0xf] %vm880, %v1040
  %1185 = vst.msk [vmem:[%s4 + $0xc0] sm:$0xf] %vm880, %v1042
  %1186 = vst.msk [vmem:[%s4 + $0xc4] sm:$0xf] %vm880, %v1044
  %1187 = vst.msk [vmem:[%s4 + $0xc8] sm:$0xf] %vm880, %v1046
  %1188 = vst.msk [vmem:[%s4 + $0xcc] sm:$0xf] %vm880, %v1048
  %1189 = vst.msk [vmem:[%s4 + $0xd0] sm:$0xf] %vm880, %v1050
  %1190 = vst.msk [vmem:[%s4 + $0xd4] sm:$0xf] %vm880, %v1052
  %1191 = vst.msk [vmem:[%s4 + $0xd8] sm:$0xf] %vm880, %v1054
  %1192 = vst.msk [vmem:[%s4 + $0xdc] sm:$0xf] %vm880, %v1056
  %1193 = vst.msk [vmem:[%s4 + $0xe0] sm:$0xf] %vm880, %v1058
  %1194 = vst.msk [vmem:[%s4 + $0xe4] sm:$0xf] %vm880, %v1060
  %1195 = vst.msk [vmem:[%s4 + $0xe8] sm:$0xf] %vm880, %v1062
  %1196 = vst.msk [vmem:[%s4 + $0xec] sm:$0xf] %vm880, %v1064
  %1197 = vst.msk [vmem:[%s4 + $0xf0] sm:$0xf] %vm880, %v1066
  %1198 = vst.msk [vmem:[%s4 + $0xf4] sm:$0xf] %vm880, %v1068
  %1199 = vst.msk [vmem:[%s4 + $0xf8] sm:$0xf] %vm880, %v1070
  %1200 = vst.msk [vmem:[%s4 + $0xfc] sm:$0xf] %vm880, %v1072
  %v1201 = vpack.c.bf16 %v312, %v308
  %v1202 = vpack.c.bf16 %v322, %v318
  %v1203 = vpack.c.bf16 %v332, %v328
  %v1204 = vpack.c.bf16 %v342, %v338
  %v1205 = vpack.c.bf16 %v352, %v348
  %v1206 = vpack.c.bf16 %v362, %v358
  %v1207 = vpack.c.bf16 %v372, %v368
  %v1208 = vpack.c.bf16 %v382, %v378
  %v1209 = vpack.c.bf16 %v392, %v388
  %v1210 = vpack.c.bf16 %v402, %v398
  %v1211 = vpack.c.bf16 %v412, %v408
  %v1212 = vpack.c.bf16 %v422, %v418
  %v1213 = vpack.c.bf16 %v432, %v428
  %v1214 = vpack.c.bf16 %v442, %v438
  %v1215 = vpack.c.bf16 %v452, %v448
  %v1216 = vpack.c.bf16 %v462, %v458
  %v1217 = vpack.c.bf16 %v472, %v468
  %v1218 = vpack.c.bf16 %v482, %v478
  %v1219 = vpack.c.bf16 %v492, %v488
  %v1220 = vpack.c.bf16 %v502, %v498
  %v1221 = vpack.c.bf16 %v512, %v508
  %v1222 = vpack.c.bf16 %v522, %v518
  %v1223 = vpack.c.bf16 %v532, %v528
  %v1224 = vpack.c.bf16 %v542, %v538
  %v1225 = vpack.c.bf16 %v552, %v548
  %v1226 = vpack.c.bf16 %v562, %v558
  %v1227 = vpack.c.bf16 %v572, %v568
  %v1228 = vpack.c.bf16 %v582, %v578
  %v1229 = vpack.c.bf16 %v592, %v588
  %v1230 = vpack.c.bf16 %v602, %v598
  %v1231 = vpack.c.bf16 %v612, %v608
  %v1232 = vpack.c.bf16 %v622, %v618
  %v1265 = vunpack.c.l.b16 %v1201
  %v1266 = vunpack.c.h.b16 %v1201
  %v1267 = vunpack.c.l.b16 %v1202
  %v1268 = vunpack.c.h.b16 %v1202
  %v1269 = vunpack.c.l.b16 %v1203
  %v1270 = vunpack.c.h.b16 %v1203
  %v1271 = vunpack.c.l.b16 %v1204
  %v1272 = vunpack.c.h.b16 %v1204
  %v1273 = vunpack.c.l.b16 %v1205
  %v1274 = vunpack.c.h.b16 %v1205
  %v1275 = vunpack.c.l.b16 %v1206
  %v1276 = vunpack.c.h.b16 %v1206
  %v1277 = vunpack.c.l.b16 %v1207
  %v1278 = vunpack.c.h.b16 %v1207
  %v1279 = vunpack.c.l.b16 %v1208
  %v1280 = vunpack.c.h.b16 %v1208
  %v1281 = vunpack.c.l.b16 %v1209
  %v1282 = vunpack.c.h.b16 %v1209
  %v1283 = vunpack.c.l.b16 %v1210
  %v1284 = vunpack.c.h.b16 %v1210
  %v1285 = vunpack.c.l.b16 %v1211
  %v1286 = vunpack.c.h.b16 %v1211
  %v1287 = vunpack.c.l.b16 %v1212
  %v1288 = vunpack.c.h.b16 %v1212
  %v1289 = vunpack.c.l.b16 %v1213
  %v1290 = vunpack.c.h.b16 %v1213
  %v1291 = vunpack.c.l.b16 %v1214
  %v1292 = vunpack.c.h.b16 %v1214
  %v1293 = vunpack.c.l.b16 %v1215
  %v1294 = vunpack.c.h.b16 %v1215
  %v1295 = vunpack.c.l.b16 %v1216
  %v1296 = vunpack.c.h.b16 %v1216
  %v1297 = vunpack.c.l.b16 %v1217
  %v1298 = vunpack.c.h.b16 %v1217
  %v1299 = vunpack.c.l.b16 %v1218
  %v1300 = vunpack.c.h.b16 %v1218
  %v1301 = vunpack.c.l.b16 %v1219
  %v1302 = vunpack.c.h.b16 %v1219
  %v1303 = vunpack.c.l.b16 %v1220
  %v1304 = vunpack.c.h.b16 %v1220
  %v1305 = vunpack.c.l.b16 %v1221
  %v1306 = vunpack.c.h.b16 %v1221
  %v1307 = vunpack.c.l.b16 %v1222
  %v1308 = vunpack.c.h.b16 %v1222
  %v1309 = vunpack.c.l.b16 %v1223
  %v1310 = vunpack.c.h.b16 %v1223
  %v1311 = vunpack.c.l.b16 %v1224
  %v1312 = vunpack.c.h.b16 %v1224
  %v1313 = vunpack.c.l.b16 %v1225
  %v1314 = vunpack.c.h.b16 %v1225
  %v1315 = vunpack.c.l.b16 %v1226
  %v1316 = vunpack.c.h.b16 %v1226
  %v1317 = vunpack.c.l.b16 %v1227
  %v1318 = vunpack.c.h.b16 %v1227
  %v1319 = vunpack.c.l.b16 %v1228
  %v1320 = vunpack.c.h.b16 %v1228
  %v1321 = vunpack.c.l.b16 %v1229
  %v1322 = vunpack.c.h.b16 %v1229
  %v1323 = vunpack.c.l.b16 %v1230
  %v1324 = vunpack.c.h.b16 %v1230
  %v1325 = vunpack.c.l.b16 %v1231
  %v1326 = vunpack.c.h.b16 %v1231
  %v1327 = vunpack.c.l.b16 %v1232
  %v1328 = vunpack.c.h.b16 %v1232
  %v1329 = vpack.c.b16 %v1265, %v1265
  %v1330 = vpack.c.b16 %v1266, %v1266
  %v1331 = vpack.c.b16 %v1267, %v1267
  %v1332 = vpack.c.b16 %v1268, %v1268
  %v1333 = vpack.c.b16 %v1269, %v1269
  %v1334 = vpack.c.b16 %v1270, %v1270
  %v1335 = vpack.c.b16 %v1271, %v1271
  %v1336 = vpack.c.b16 %v1272, %v1272
  %v1337 = vpack.c.b16 %v1273, %v1273
  %v1338 = vpack.c.b16 %v1274, %v1274
  %v1339 = vpack.c.b16 %v1275, %v1275
  %v1340 = vpack.c.b16 %v1276, %v1276
  %v1341 = vpack.c.b16 %v1277, %v1277
  %v1342 = vpack.c.b16 %v1278, %v1278
  %v1343 = vpack.c.b16 %v1279, %v1279
  %v1344 = vpack.c.b16 %v1280, %v1280
  %v1345 = vpack.c.b16 %v1281, %v1281
  %v1346 = vpack.c.b16 %v1282, %v1282
  %v1347 = vpack.c.b16 %v1283, %v1283
  %v1348 = vpack.c.b16 %v1284, %v1284
  %v1349 = vpack.c.b16 %v1285, %v1285
  %v1350 = vpack.c.b16 %v1286, %v1286
  %v1351 = vpack.c.b16 %v1287, %v1287
  %v1352 = vpack.c.b16 %v1288, %v1288
  %v1353 = vpack.c.b16 %v1289, %v1289
  %v1354 = vpack.c.b16 %v1290, %v1290
  %v1355 = vpack.c.b16 %v1291, %v1291
  %v1356 = vpack.c.b16 %v1292, %v1292
  %v1357 = vpack.c.b16 %v1293, %v1293
  %v1358 = vpack.c.b16 %v1294, %v1294
  %v1359 = vpack.c.b16 %v1295, %v1295
  %v1360 = vpack.c.b16 %v1296, %v1296
  %v1361 = vpack.c.b16 %v1297, %v1297
  %v1362 = vpack.c.b16 %v1298, %v1298
  %v1363 = vpack.c.b16 %v1299, %v1299
  %v1364 = vpack.c.b16 %v1300, %v1300
  %v1365 = vpack.c.b16 %v1301, %v1301
  %v1366 = vpack.c.b16 %v1302, %v1302
  %v1367 = vpack.c.b16 %v1303, %v1303
  %v1368 = vpack.c.b16 %v1304, %v1304
  %v1369 = vpack.c.b16 %v1305, %v1305
  %v1370 = vpack.c.b16 %v1306, %v1306
  %v1371 = vpack.c.b16 %v1307, %v1307
  %v1372 = vpack.c.b16 %v1308, %v1308
  %v1373 = vpack.c.b16 %v1309, %v1309
  %v1374 = vpack.c.b16 %v1310, %v1310
  %v1375 = vpack.c.b16 %v1311, %v1311
  %v1376 = vpack.c.b16 %v1312, %v1312
  %v1377 = vpack.c.b16 %v1313, %v1313
  %v1378 = vpack.c.b16 %v1314, %v1314
  %v1379 = vpack.c.b16 %v1315, %v1315
  %v1380 = vpack.c.b16 %v1316, %v1316
  %v1381 = vpack.c.b16 %v1317, %v1317
  %v1382 = vpack.c.b16 %v1318, %v1318
  %v1383 = vpack.c.b16 %v1319, %v1319
  %v1384 = vpack.c.b16 %v1320, %v1320
  %v1385 = vpack.c.b16 %v1321, %v1321
  %v1386 = vpack.c.b16 %v1322, %v1322
  %v1387 = vpack.c.b16 %v1323, %v1323
  %v1388 = vpack.c.b16 %v1324, %v1324
  %v1389 = vpack.c.b16 %v1325, %v1325
  %v1390 = vpack.c.b16 %v1326, %v1326
  %v1391 = vpack.c.b16 %v1327, %v1327
  %v1392 = vpack.c.b16 %v1328, %v1328
  %1457 = vst.msk [vmem:[%s5] sm:$0xf] %vm880, %v1329
  %1458 = vst.msk [vmem:[%s5 + $0x4] sm:$0xf] %vm880, %v1330
  %1459 = vst.msk [vmem:[%s5 + $0x8] sm:$0xf] %vm880, %v1331
  %1460 = vst.msk [vmem:[%s5 + $0xc] sm:$0xf] %vm880, %v1332
  %1461 = vst.msk [vmem:[%s5 + $0x10] sm:$0xf] %vm880, %v1333
  %1462 = vst.msk [vmem:[%s5 + $0x14] sm:$0xf] %vm880, %v1334
  %1463 = vst.msk [vmem:[%s5 + $0x18] sm:$0xf] %vm880, %v1335
  %1464 = vst.msk [vmem:[%s5 + $0x1c] sm:$0xf] %vm880, %v1336
  %1465 = vst.msk [vmem:[%s5 + $0x20] sm:$0xf] %vm880, %v1337
  %1466 = vst.msk [vmem:[%s5 + $0x24] sm:$0xf] %vm880, %v1338
  %1467 = vst.msk [vmem:[%s5 + $0x28] sm:$0xf] %vm880, %v1339
  %1468 = vst.msk [vmem:[%s5 + $0x2c] sm:$0xf] %vm880, %v1340
  %1469 = vst.msk [vmem:[%s5 + $0x30] sm:$0xf] %vm880, %v1341
  %1470 = vst.msk [vmem:[%s5 + $0x34] sm:$0xf] %vm880, %v1342
  %1471 = vst.msk [vmem:[%s5 + $0x38] sm:$0xf] %vm880, %v1343
  %1472 = vst.msk [vmem:[%s5 + $0x3c] sm:$0xf] %vm880, %v1344
  %1473 = vst.msk [vmem:[%s5 + $0x40] sm:$0xf] %vm880, %v1345
  %1474 = vst.msk [vmem:[%s5 + $0x44] sm:$0xf] %vm880, %v1346
  %1475 = vst.msk [vmem:[%s5 + $0x48] sm:$0xf] %vm880, %v1347
  %1476 = vst.msk [vmem:[%s5 + $0x4c] sm:$0xf] %vm880, %v1348
  %1477 = vst.msk [vmem:[%s5 + $0x50] sm:$0xf] %vm880, %v1349
  %1478 = vst.msk [vmem:[%s5 + $0x54] sm:$0xf] %vm880, %v1350
  %1479 = vst.msk [vmem:[%s5 + $0x58] sm:$0xf] %vm880, %v1351
  %1480 = vst.msk [vmem:[%s5 + $0x5c] sm:$0xf] %vm880, %v1352
  %1481 = vst.msk [vmem:[%s5 + $0x60] sm:$0xf] %vm880, %v1353
  %1482 = vst.msk [vmem:[%s5 + $0x64] sm:$0xf] %vm880, %v1354
  %1483 = vst.msk [vmem:[%s5 + $0x68] sm:$0xf] %vm880, %v1355
  %1484 = vst.msk [vmem:[%s5 + $0x6c] sm:$0xf] %vm880, %v1356
  %1485 = vst.msk [vmem:[%s5 + $0x70] sm:$0xf] %vm880, %v1357
  %1486 = vst.msk [vmem:[%s5 + $0x74] sm:$0xf] %vm880, %v1358
  %1487 = vst.msk [vmem:[%s5 + $0x78] sm:$0xf] %vm880, %v1359
  %1488 = vst.msk [vmem:[%s5 + $0x7c] sm:$0xf] %vm880, %v1360
  %1489 = vst.msk [vmem:[%s5 + $0x80] sm:$0xf] %vm880, %v1361
  %1490 = vst.msk [vmem:[%s5 + $0x84] sm:$0xf] %vm880, %v1362
  %1491 = vst.msk [vmem:[%s5 + $0x88] sm:$0xf] %vm880, %v1363
  %1492 = vst.msk [vmem:[%s5 + $0x8c] sm:$0xf] %vm880, %v1364
  %1493 = vst.msk [vmem:[%s5 + $0x90] sm:$0xf] %vm880, %v1365
  %1494 = vst.msk [vmem:[%s5 + $0x94] sm:$0xf] %vm880, %v1366
  %1495 = vst.msk [vmem:[%s5 + $0x98] sm:$0xf] %vm880, %v1367
  %1496 = vst.msk [vmem:[%s5 + $0x9c] sm:$0xf] %vm880, %v1368
  %1497 = vst.msk [vmem:[%s5 + $0xa0] sm:$0xf] %vm880, %v1369
  %1498 = vst.msk [vmem:[%s5 + $0xa4] sm:$0xf] %vm880, %v1370
  %1499 = vst.msk [vmem:[%s5 + $0xa8] sm:$0xf] %vm880, %v1371
  %1500 = vst.msk [vmem:[%s5 + $0xac] sm:$0xf] %vm880, %v1372
  %1501 = vst.msk [vmem:[%s5 + $0xb0] sm:$0xf] %vm880, %v1373
  %1502 = vst.msk [vmem:[%s5 + $0xb4] sm:$0xf] %vm880, %v1374
  %1503 = vst.msk [vmem:[%s5 + $0xb8] sm:$0xf] %vm880, %v1375
  %1504 = vst.msk [vmem:[%s5 + $0xbc] sm:$0xf] %vm880, %v1376
  %1505 = vst.msk [vmem:[%s5 + $0xc0] sm:$0xf] %vm880, %v1377
  %1506 = vst.msk [vmem:[%s5 + $0xc4] sm:$0xf] %vm880, %v1378
  %1507 = vst.msk [vmem:[%s5 + $0xc8] sm:$0xf] %vm880, %v1379
  %1508 = vst.msk [vmem:[%s5 + $0xcc] sm:$0xf] %vm880, %v1380
  %1509 = vst.msk [vmem:[%s5 + $0xd0] sm:$0xf] %vm880, %v1381
  %1510 = vst.msk [vmem:[%s5 + $0xd4] sm:$0xf] %vm880, %v1382
  %1511 = vst.msk [vmem:[%s5 + $0xd8] sm:$0xf] %vm880, %v1383
  %1512 = vst.msk [vmem:[%s5 + $0xdc] sm:$0xf] %vm880, %v1384
  %1513 = vst.msk [vmem:[%s5 + $0xe0] sm:$0xf] %vm880, %v1385
  %1514 = vst.msk [vmem:[%s5 + $0xe4] sm:$0xf] %vm880, %v1386
  %1515 = vst.msk [vmem:[%s5 + $0xe8] sm:$0xf] %vm880, %v1387
  %1516 = vst.msk [vmem:[%s5 + $0xec] sm:$0xf] %vm880, %v1388
  %1517 = vst.msk [vmem:[%s5 + $0xf0] sm:$0xf] %vm880, %v1389
  %1518 = vst.msk [vmem:[%s5 + $0xf4] sm:$0xf] %vm880, %v1390
  %1519 = vst.msk [vmem:[%s5 + $0xf8] sm:$0xf] %vm880, %v1391
  %1520 = vst.msk [vmem:[%s5 + $0xfc] sm:$0xf] %vm880, %v1392
  // Predicated region
  $region14: #{tpu_custom_call.1} parent=0 // pred_check
    _
  $region15: #{tpu_custom_call.1} parent=0 // pred_check_branch
    %1522 = sbr.rel (0) target = $region17
  $region16: #{tpu_custom_call.1} parent=0 // pred_region
    _
  $region17: #{tpu_custom_call.1} parent=0 // pred_fallthru
    _
  // Predicated region
  $region18: #{tpu_custom_call.1} parent=0 // pred_check
    _
  $region19: #{tpu_custom_call.1} parent=0 // pred_check_branch
    %1524 = sbr.rel (0) target = $region21
  $region20: #{tpu_custom_call.1} parent=0 // pred_region
    _
  $region21: #{tpu_custom_call.1} parent=0 // pred_fallthru
    _
  // Predicated region
  $region22: #{tpu_custom_call.1} parent=0 // pred_check
    _
  $region23: #{tpu_custom_call.1} parent=0 // pred_check_branch
    %1526 = sbr.rel (0) target = $region25
  $region24: #{tpu_custom_call.1} parent=0 // pred_region
    _
  $region25: #{tpu_custom_call.1} parent=0 // pred_fallthru
    _
  // Predicated region
  $region26: #{tpu_custom_call.1} parent=0 // pred_check
    _
  $region27: #{tpu_custom_call.1} parent=0 // pred_check_branch
    %1528 = sbr.rel (0) target = $region29
  $region28: #{tpu_custom_call.1} parent=0 // pred_region
    _
  $region29: #{tpu_custom_call.1} parent=0 // pred_fallthru
    _
  // Predicated region
  $region30: #{tpu_custom_call.1} parent=0 // pred_check
    _
  $region31: #{tpu_custom_call.1} parent=0 // pred_check_branch
    %1530 = sbr.rel (0) target = $region33
  $region32: #{tpu_custom_call.1} parent=0 // pred_region
    _
  $region33: #{tpu_custom_call.1} parent=0 // pred_fallthru
    _
  // Predicated region
  $region34: #{tpu_custom_call.1} parent=0 // pred_check
    _
  $region35: #{tpu_custom_call.1} parent=0 // pred_check_branch
    %1532 = sbr.rel (0) target = $region37
  $region36: #{tpu_custom_call.1} parent=0 // pred_region
    _
  $region37: #{tpu_custom_call.1} parent=0 // pred_fallthru
    _

</llo_original>
